<compile_context>
chip_gen: v6e
topology: v6e:2x2x1
jax: 0.10.0
libtpu: 0.0.40
codegen_flags: <defaults>
</compile_context>

<pallas_src>
import math

import jax
import jax.numpy as jnp
from jax.experimental import pallas as pl
from jax.experimental.pallas import tpu as pltpu


def _round_up(x, m):
    return (x + m - 1) // m * m


def _tpu_vmem_capacity_bytes():
    """Best-effort per-core VMEM capacity query; conservative fallback."""
    try:
        info = pltpu.get_tpu_info()
        for name in ("vmem_capacity_bytes", "vmem_size_bytes", "vmem_bytes"):
            cap = getattr(info, name, None)
            if cap:
                return int(cap)
    except Exception:
        pass
    return 64 * 1024 * 1024  # assume the smallest (v7x per-TensorCore)


# ----------------------------- Pallas kernels --------------------------------
def hw_kernel(h_ref, w_ref, g_ref):
    """Feature-transform prologue:  G = H @ W  (f32 accumulate, bf16 store)."""
    g_ref[...] = jnp.dot(h_ref[...], w_ref[...],
                         preferred_element_type=jnp.float32).astype(g_ref.dtype)


def agg_kernel_single(a_ref, g_ref, bias_ref, out_ref):
    """out = relu(A @ G + b) when the node reduction fits one k step
    (no accumulator scratch, no RMW, single lane-dense store)."""
    z = jnp.dot(a_ref[...], g_ref[...], preferred_element_type=jnp.float32)
    out_ref[...] = jnp.maximum(z + bias_ref[...], 0.0).astype(out_ref.dtype)


def agg_kernel_multi(a_ref, g_ref, bias_ref, out_ref, acc_ref):
    """out = relu(A @ G + b) with f32 VMEM accumulator over the k (node) axis;
    bias+relu epilogue only on the last reduction step."""
    k = pl.program_id(2)

    @pl.when(k == 0)
    def _():
        acc_ref[...] = jnp.zeros_like(acc_ref)

    acc_ref[...] += jnp.dot(a_ref[...], g_ref[...],
                            preferred_element_type=jnp.float32)

    @pl.when(k == pl.num_programs(2) - 1)
    def _():
        out_ref[...] = jnp.maximum(acc_ref[...] + bias_ref[...],
                                   0.0).astype(out_ref.dtype)


# ------------------------------ pallas_call wrappers --------------------------
def _feature_transform(h, w_stack, *, tm, vmem_limit):
    """G[b] = H @ W[b]   (H shared, 2D) or   G[b] = H[b] @ W[b]  (H stacked, 3D).
    Returns (nb, Np, Fout) bf16."""
    nb, fin, fout = w_stack.shape
    np_ = h.shape[-2]
    tmp = 512 if (tm >= 512 and tm % 512 == 0) else tm   # tmp always divides Np
    grid = (nb, np_ // tmp)

    if h.ndim == 2:     # layer 1: X shared by both branches (no duplication)
        h_spec = pl.BlockSpec((tmp, fin), lambda b, i: (i, 0))
    else:               # layer 2: per-branch hidden features
        h_spec = pl.BlockSpec((None, tmp, fin), lambda b, i: (b, i, 0))
    w_spec = pl.BlockSpec((None, fin, fout), lambda b, i: (b, 0, 0))
    g_spec = pl.BlockSpec((None, tmp, fout), lambda b, i: (b, i, 0))

    return pl.pallas_call(
        hw_kernel,
        out_shape=jax.ShapeDtypeStruct((nb, np_, fout), jnp.bfloat16),
        grid_spec=pltpu.PrefetchScalarGridSpec(
            num_scalar_prefetch=0, grid=grid,
            in_specs=[h_spec, w_spec], out_specs=g_spec),
        compiler_params=pltpu.CompilerParams(
            dimension_semantics=("parallel", "parallel"),
            vmem_limit_bytes=vmem_limit),
    )(h, w_stack)


def _gcn_aggregate(a_stack, g_stack, b_stack, *, out_layout, out_dtype, tm, tk,
                   vmem_limit):
    """relu(A[b] @ G[b] + bias[b]) for both branches.
    out_layout: 'stacked' -> (2, Np, Fout);  'concat' -> (Np, 2*Fout)."""
    nb, np_, _ = a_stack.shape
    fout = g_stack.shape[-1]
    k_steps = np_ // tk
    single_k = k_steps == 1

    if out_layout == "stacked":
        out_shape = jax.ShapeDtypeStruct((nb, np_, fout), out_dtype)
    else:  # branch b writes column-block b -> [x1 | x2] slab for free
        out_shape = jax.ShapeDtypeStruct((np_, nb * fout), out_dtype)

    if single_k:
        grid = (nb, np_ // tm)
        a_spec = pl.BlockSpec((None, tm, tk), lambda b, i: (b, i, 0))
        g_spec = pl.BlockSpec((None, tk, fout), lambda b, i: (b, 0, 0))
        bias_spec = pl.BlockSpec((None, 1, fout), lambda b, i: (b, 0, 0))
        if out_layout == "stacked":
            out_spec = pl.BlockSpec((None, tm, fout), lambda b, i: (b, i, 0))
        else:
            out_spec = pl.BlockSpec((tm, fout), lambda b, i: (i, b))
        kernel, scratch = agg_kernel_single, []
        semantics = ("parallel", "parallel")
    else:
        grid = (nb, np_ // tm, k_steps)
        a_spec = pl.BlockSpec((None, tm, tk), lambda b, i, k: (b, i, k))
        g_spec = pl.BlockSpec((None, tk, fout), lambda b, i, k: (b, k, 0))
        bias_spec = pl.BlockSpec((None, 1, fout), lambda b, i, k: (b, 0, 0))
        if out_layout == "stacked":
            out_spec = pl.BlockSpec((None, tm, fout), lambda b, i, k: (b, i, 0))
        else:
            out_spec = pl.BlockSpec((tm, fout), lambda b, i, k: (i, b))
        kernel = agg_kernel_multi
        scratch = [pltpu.VMEM((tm, fout), jnp.float32)]
        semantics = ("parallel", "parallel", "arbitrary")

    return pl.pallas_call(
        kernel,
        out_shape=out_shape,
        grid_spec=pltpu.PrefetchScalarGridSpec(
            num_scalar_prefetch=0,
            grid=grid,
            in_specs=[a_spec, g_spec, bias_spec],
            out_specs=out_spec,
            scratch_shapes=scratch,
        ),
        compiler_params=pltpu.CompilerParams(
            dimension_semantics=semantics,
            vmem_limit_bytes=vmem_limit,
        ),
    )(a_stack, g_stack, b_stack)


# --------------------------------- wrapper ------------------------------------
def dual_gcn_pallas(x, a_hat, a_hat_cross, params, *, tm=None, tk=None):
    """x: (N, input_dim) f32; a_hat / a_hat_cross: (N, N) f32 normalized adj.
    tm/tk default to an auto, generation-aware choice (large tiles)."""
    n, input_dim = x.shape
    hidden_dim = params["w1"].shape[1]
    output_dim = params["w2"].shape[1]

    lane = 128
    # lane-dense feature padding
    f_in = _round_up(input_dim, lane)
    f_h = _round_up(hidden_dim, lane)
    f_out = _round_up(output_dim, lane)
    fmax = max(f_h, f_out)

    # generation-aware tile cap / VMEM budget
    vmem_cap = _tpu_vmem_capacity_bytes()
    if vmem_cap >= 96 * 1024 * 1024:        # v5e / v6e: 128 MiB physical VMEM
        tile_cap, vmem_limit = 4096, 100 * 1024 * 1024
    else:                                   # v7x: 64 MiB per TensorCore
        tile_cap, vmem_limit = 2048, 40 * 1024 * 1024

    # shrink the cap if the working set (2x A, 2x G, 2x out, acc) would not fit
    def _est(t):
        return (2 * t * t * 2) + (2 * t * fmax * 2) + (2 * t * fmax * 4) \
               + (t * fmax * 4)
    while tile_cap > 256 and _est(tile_cap) > vmem_limit:
        tile_cap //= 2

    n_min = _round_up(n, lane)
    tile_m = min(_round_up(tm, lane) if tm else tile_cap, n_min)
    tile_k = min(_round_up(tk, lane) if tk else tile_cap, n_min)
    # pad nodes so BOTH tile sizes divide evenly (lcm fixes tm != tk cases)
    n_pad = _round_up(n_min, math.lcm(tile_m, tile_k))

    def pad2(m, r, c):
        return jnp.pad(m, ((0, r - m.shape[0]), (0, c - m.shape[1])))

    bf16 = jnp.bfloat16
    x_p = pad2(x, n_pad, f_in).astype(bf16)
    a_stack = jnp.stack([pad2(a_hat, n_pad, n_pad),
                         pad2(a_hat_cross, n_pad, n_pad)]).astype(bf16)
    w1 = jnp.stack([pad2(params["w1"], f_in, f_h),
                    pad2(params["wc1"], f_in, f_h)]).astype(bf16)
    b1 = jnp.stack([pad2(params["b1"], 1, f_h),
                    pad2(params["bc1"], 1, f_h)]).astype(jnp.float32)
    w2 = jnp.stack([pad2(params["w2"], f_h, f_out),
                    pad2(params["wc2"], f_h, f_out)]).astype(bf16)
    b2 = jnp.stack([pad2(params["b2"], 1, f_out),
                    pad2(params["bc2"], 1, f_out)]).astype(jnp.float32)

    # ---- layer 1:  G1 = X @ W1 (prologue), H1 = relu(A @ G1 + b1), stacked
    g1 = _feature_transform(x_p, w1, tm=tile_m, vmem_limit=vmem_limit)
    h1 = _gcn_layer_out = _gcn_aggregate(
        a_stack, g1, b1, out_layout="stacked", out_dtype=bf16,
        tm=tile_m, tk=tile_k, vmem_limit=vmem_limit)
    # (dropout between layers treated as identity -- see TODO at top)

    # ---- layer 2:  G2 = H1 @ W2 (prologue), out = [relu(A@G2_0+b) | relu(Ac@G2_1+b)]
    g2 = _feature_transform(h1, w2, tm=tile_m, vmem_limit=vmem_limit)
    out_p = _gcn_aggregate(
        a_stack, g2, b2, out_layout="concat", out_dtype=jnp.float32,
        tm=tile_m, tk=tile_k, vmem_limit=vmem_limit)

    # strip node padding and padded feature lanes: [x1 | x2]
    return jnp.concatenate([out_p[:n, :output_dim],
                            out_p[:n, f_out:f_out + output_dim]], axis=-1)


# --------------------------------- JAX glue ------------------------------------
def normalized_adjacency(edge_index, num_nodes):
    """Dense GCN normalization: D^{-1/2} (A + I) D^{-1/2}."""
    src, dst = edge_index[0], edge_index[1]
    loop = jnp.arange(num_nodes, dtype=edge_index.dtype)
    src = jnp.concatenate([src, loop])
    dst = jnp.concatenate([dst, loop])
    a = jnp.zeros((num_nodes, num_nodes), jnp.float32).at[dst, src].add(1.0)
    deg = a.sum(axis=1)
    dinv = jnp.where(deg > 0, 1.0 / jnp.sqrt(deg), 0.0)
    return a * dinv[:, None] * dinv[None, :]


def init_params(key, input_dim, hidden_dim, output_dim):
    ks = jax.random.split(key, 4)

    def glorot(k, fan_in, fan_out):
        lim = jnp.sqrt(6.0 / (fan_in + fan_out))
        return jax.random.uniform(k, (fan_in, fan_out), jnp.float32, -lim, lim)

    return {
        "w1": glorot(ks[0], input_dim, hidden_dim),
        "b1": jnp.zeros((1, hidden_dim), jnp.float32),
        "w2": glorot(ks[1], hidden_dim, output_dim),
        "b2": jnp.zeros((1, output_dim), jnp.float32),
        "wc1": glorot(ks[2], input_dim, hidden_dim),
        "bc1": jnp.zeros((1, hidden_dim), jnp.float32),
        "wc2": glorot(ks[3], hidden_dim, output_dim),
        "bc2": jnp.zeros((1, output_dim), jnp.float32),
    }


def dual_gcn_reference(x, a, ac, p):
    def gcn(adj, h, w, b):
        return adj @ (h @ w) + b
    h1 = jax.nn.relu(gcn(a, x, p["w1"], p["b1"]))
    h1 = jax.nn.relu(gcn(a, h1, p["w2"], p["b2"]))
    h2 = jax.nn.relu(gcn(ac, x, p["wc1"], p["bc1"]))
    h2 = jax.nn.relu(gcn(ac, h2, p["wc2"], p["bc2"]))
    return jnp.concatenate([h1, h2], axis=-1)


if __name__ == "__main__":
    N, INPUT_DIM, HIDDEN_DIM, OUTPUT_DIM = 200, 16, 32, 32

    key = jax.random.PRNGKey(0)
    k_x, k_p = jax.random.split(key)

    # node features (N, input_dim)
    x = jax.random.normal(k_x, (N, INPUT_DIM), jnp.float32)

    # deterministic symmetric ring graph for edge_index,
    # a "skip-2" symmetric graph for edge_index_cross
    idx = jnp.arange(N, dtype=jnp.int32)
    ring_src = jnp.concatenate([idx, (idx + 1) % N])
    ring_dst = jnp.concatenate([(idx + 1) % N, idx])
    edge_index = jnp.stack([ring_src, ring_dst])              # (2, 2N)

    cr_src = jnp.concatenate([idx, (idx + 2) % N])
    cr_dst = jnp.concatenate([(idx + 2) % N, idx])
    edge_index_cross = jnp.stack([cr_src, cr_dst])            # (2, 2N)

    a_hat = normalized_adjacency(edge_index, N)
    a_hat_cross = normalized_adjacency(edge_index_cross, N)
    params = init_params(k_p, INPUT_DIM, HIDDEN_DIM, OUTPUT_DIM)

    # auto (generation-aware) tile selection; for N=200 this collapses the
    # node-reduction axis to a single step (no accumulator kernel variant)
    out = dual_gcn_pallas(x, a_hat, a_hat_cross, params)
    out = jax.block_until_ready(out)
    assert out.shape == (N, 2 * OUTPUT_DIM), out.shape

    # reference in f32 on bf16-rounded inputs (kernel computes bf16 / f32-acc)
    bf = lambda t: t.astype(jnp.bfloat16).astype(jnp.float32)
    p_bf = {k: bf(v) for k, v in params.items()}
    ref = dual_gcn_reference(bf(x), bf(a_hat), bf(a_hat_cross), p_bf)
    err = float(jnp.max(jnp.abs(out - ref)))
    assert err < 5e-2, f"max abs err vs reference: {err}"

    print("KERNEL_OK")
</pallas_src>

<mosaic_0001>
module attributes {stable_mosaic.version = 11 : i64} {
  func.func @hw_kernel(%arg0: i32, %arg1: i32, %arg2: memref<256x128xbf16, #tpu.memory_space<vmem>>, %arg3: memref<1x128x128xbf16, #tpu.memory_space<vmem>>, %arg4: memref<1x256x128xbf16, #tpu.memory_space<vmem>>) attributes {dimension_semantics = [#tpu.dimension_semantics<parallel>, #tpu.dimension_semantics<parallel>], iteration_bounds = array<i64: 2, 1>, scalar_prefetch = 0 : i64, scratch_operands = 0 : i64, tpu.core_type = #tpu.core_type<tc>, window_params = [{transform_indices = @transform_0, window_bounds = array<i64: 256, 128>}, {transform_indices = @transform_1, window_bounds = array<i64: 1, 128, 128>}, {transform_indices = @transform_2, window_bounds = array<i64: 1, 256, 128>}]} {
    %c0 = arith.constant 0 : index
    %c0_0 = arith.constant 0 : index
    %0 = vector.load %arg2[%c0, %c0_0] : memref<256x128xbf16, #tpu.memory_space<vmem>>, vector<256x128xbf16>
    %c0_1 = arith.constant 0 : index
    %c0_2 = arith.constant 0 : index
    %c0_3 = arith.constant 0 : index
    %1 = vector.load %arg3[%c0_1, %c0_2, %c0_3] : memref<1x128x128xbf16, #tpu.memory_space<vmem>>, vector<1x128x128xbf16>
    %2 = vector.shape_cast %1 : vector<1x128x128xbf16> to vector<128x128xbf16>
    %cst = arith.constant dense<0.000000e+00> : vector<256x128xf32>
    %3 = tpu.matmul %0, %2, %cst {dimension_numbers = #tpu.dot_dimension_numbers<[1], [0], [0], [1], [0, 0, 1, 1], [], []>} : vector<256x128xbf16>, vector<128x128xbf16>, vector<256x128xf32> -> vector<256x128xf32>
    %4 = arith.truncf %3 : vector<256x128xf32> to vector<256x128xbf16>
    %c0_4 = arith.constant 0 : index
    %c0_5 = arith.constant 0 : index
    %c0_6 = arith.constant 0 : index
    %5 = vector.load %arg4[%c0_4, %c0_5, %c0_6] : memref<1x256x128xbf16, #tpu.memory_space<vmem>>, vector<1x256x128xbf16>
    %6 = vector.shape_cast %5 : vector<1x256x128xbf16> to vector<256x128xbf16>
    %7 = vector.shape_cast %4 : vector<256x128xbf16> to vector<1x256x128xbf16>
    tpu.vector_store %arg4[%c0_4, %c0_5, %c0_6], %7 {strides = array<i32>} : memref<1x256x128xbf16, #tpu.memory_space<vmem>>, vector<1x256x128xbf16>,
    return
  }
  func.func @transform_0(%arg0: i32, %arg1: i32) -> (i32, i32) {
    %c0_i32 = arith.constant 0 : i32
    %c0_i32_0 = arith.constant 0 : i32
    return %arg1, %c0_i32 : i32, i32
  }
  func.func @transform_1(%arg0: i32, %arg1: i32) -> (i32, i32, i32) {
    %c0_i32 = arith.constant 0 : i32
    %c0_i32_0 = arith.constant 0 : i32
    %c0_i32_1 = arith.constant 0 : i32
    return %arg0, %c0_i32, %c0_i32_0 : i32, i32, i32
  }
  func.func @transform_2(%arg0: i32, %arg1: i32) -> (i32, i32, i32) {
    %c0_i32 = arith.constant 0 : i32
    %c0_i32_0 = arith.constant 0 : i32
    return %arg0, %arg1, %c0_i32 : i32, i32, i32
  }
}

</mosaic_0001>

<llo_original>
// kernel: tpu_custom_call.1
$region0: #{tpu_custom_call.1}
  #allocation0 [shape = 'u32[]', space=smem, size = 0x4, offset = 0x4, fixed_abs, tag = 'smem constant byte address 0x4 - core index']
  #allocation1 [shape = 'u32[144,128]{1,0:T(1,128)}', space=vmem, size = 0x12000, scoped, tag = 'internal scratch']
  %s0 = inlined_call_operand.hbm [shape: bf16[256,128], index: 0, kind: input, shape index: {}]
  %s1 = inlined_call_operand.hbm [shape: bf16[2,128,128], index: 1, kind: input, shape index: {}]
  %s2 = inlined_call_operand.hbm [shape: bf16[2,256,128], index: 2, kind: output, shape index: {}]
  %s3 = sld [smem:[#allocation0]]
  $region49: #{tpu_custom_call.1} parent=0
    _
  %s5 = ssub.s32 1, %s3
  %s6 = scalar_select 0, %s5, %s3
  $region1: #{tpu_custom_call.1} parent=0
    #allocation2 [shape = 'u8[65536]{0}', space=vmem, size = 0x10000, scoped, tag = 'input window, operand 0, single buffered']
    #allocation3 [shape = 's32[2]{0}', space=sflag, size = 0x8, scoped, tag = 'scoped memory for tpu_custom_call.1']
    #allocation4 [shape = 's32[2]{0}', space=sflag, size = 0x8, scoped, tag = 'scoped memory for tpu_custom_call.1']
    #allocation5 [shape = 'u8[65536]{0}', space=vmem, size = 0x10000, scoped, tag = 'input window, operand 1']
    #allocation6 [shape = 's32[2]{0}', space=sflag, size = 0x8, scoped, tag = 'scoped memory for tpu_custom_call.1']
    #allocation7 [shape = 'u8[131072]{0}', space=vmem, size = 0x20000, scoped, tag = 'output window, operand 0']
    %7 = vsyncpa [#allocation3], 0
    %8 = vsyncpa [#allocation6], 0
    %s9 = scalar_lea.sflag [#allocation6], 1
    %10 = vsyncpa %s9, 0
    %11 = vsyncpa [#allocation4], 0
    %s12 = scalar_lea.sflag [#allocation4], 1
    %13 = vsyncpa %s12, 0
    loop: start=0, step=1, limit=4
    $region2: #{tpu_custom_call.1} parent=1 // loop_pre_header
      _
    $region3: #{tpu_custom_call.1} parent=1 // loop_header
      %s15 = sphi 0, %s19
      %p16 = scmp.ge.s32.totalorder %s15, 4
      %s22 = sphi 0, %s34
      %s23 = sphi 0, %s30
      %s24 = sphi 0, %s22
      %s25 = sphi 0, %s23
      %s26 = sphi 0, %s24
      %s27 = sphi 0, %s25
      %s37 = sphi 0, %s39
      %s40 = sphi 0, %s37
      %s41 = sphi 0, %s40
      %s57 = sphi 0, %s41
      %s63 = sphi 0, %s65
      %s66 = sphi 0, %s63
      %s67 = sphi 0, %s66
      %s83 = sphi 0, %s67
      %s91 = sphi 0, %s93
      %s94 = sphi 0, %s91
      %s95 = sphi 0, %s94
      %s111 = sphi 0, %s95
    $region4: #{tpu_custom_call.1} parent=1 // loop_header_branch
      %18 = sbr.rel (%p16) target = $region8
    $region5: #{tpu_custom_call.1} parent=1 // loop_body
      %s20 = ssub.s32 %s15, 1
      %s21 = ssub.s32 %s15, 2
      %s28 = sadd.s32 1, %s23
      %p29 = scmp.ge.s32.totalorder %s28, 1
      %s30 = scalar_select %p29, 0, %s28
      %s31 = sadd.s32 1, %s22
      %s32 = scalar_select %p29, %s31, %s22
      %p33 = scmp.ge.s32.totalorder %s32, 2
      %s34 = scalar_select %p33, 0, %s32
      %s35 = ssub.s32 %s23, %s30
      %p36 = scmp.eq.s32.totalorder %s35, 0
      %s38 = sadd.s32 %s37, 1
      %s39 = scalar_select %p36, %s37, %s38
      %p42 = pneg %p36
      %p43 = scmp.eq.s32.totalorder %s15, 1
      %p44 = por %p42, %p43
      %p45 = scmp.ne.s32.totalorder %s37, %s40
      %p46 = scmp.eq.s32.totalorder %s15, 0
      %p47 = por %p45, %p46
      %p48 = scmp.ne.s32.totalorder %s37, %s40
      %p49 = scmp.eq.s32.totalorder %s20, 1
      %p50 = por %p48, %p49
      %p51 = scmp.ne.s32.totalorder %s40, %s41
      %p52 = scmp.eq.s32.totalorder %s20, 0
      %p53 = por %p51, %p52
      %p54 = scmp.ne.s32.totalorder %s40, %s41
      %p55 = scmp.eq.s32.totalorder %s21, 1
      %p56 = por %p54, %p55
      %p58 = scmp.ne.s32.totalorder %s41, %s57
      %p59 = scmp.eq.s32.totalorder %s21, 0
      %p60 = por %p58, %p59
      %s61 = ssub.s32 %s22, %s34
      %p62 = scmp.eq.s32.totalorder %s61, 0
      %s64 = sadd.s32 %s63, 1
      %s65 = scalar_select %p62, %s63, %s64
      %p68 = pneg %p62
      %p69 = scmp.eq.s32.totalorder %s15, 1
      %p70 = por %p68, %p69
      %p71 = scmp.ne.s32.totalorder %s63, %s66
      %p72 = scmp.eq.s32.totalorder %s15, 0
      %p73 = por %p71, %p72
      %p74 = scmp.ne.s32.totalorder %s63, %s66
      %p75 = scmp.eq.s32.totalorder %s20, 1
      %p76 = por %p74, %p75
      %p77 = scmp.ne.s32.totalorder %s66, %s67
      %p78 = scmp.eq.s32.totalorder %s20, 0
      %p79 = por %p77, %p78
      %p80 = scmp.ne.s32.totalorder %s66, %s67
      %p81 = scmp.eq.s32.totalorder %s21, 1
      %p82 = por %p80, %p81
      %p84 = scmp.ne.s32.totalorder %s67, %s83
      %p85 = scmp.eq.s32.totalorder %s21, 0
      %p86 = por %p84, %p85
      %s87 = ssub.s32 %s22, %s34
      %s88 = ssub.s32 %s23, %s30
      %s89 = sor.u32 %s87, %s88
      %p90 = scmp.eq.s32.totalorder %s89, 0
      %s92 = sadd.s32 %s91, 1
      %s93 = scalar_select %p90, %s91, %s92
      %p96 = pneg %p90
      %p97 = scmp.eq.s32.totalorder %s15, 1
      %p98 = por %p96, %p97
      %p99 = scmp.ne.s32.totalorder %s91, %s94
      %p100 = scmp.eq.s32.totalorder %s15, 0
      %p101 = por %p99, %p100
      %p102 = scmp.ne.s32.totalorder %s91, %s94
      %p103 = scmp.eq.s32.totalorder %s20, 1
      %p104 = por %p102, %p103
      %p105 = scmp.ne.s32.totalorder %s94, %s95
      %p106 = scmp.eq.s32.totalorder %s20, 0
      %p107 = por %p105, %p106
      %p108 = scmp.ne.s32.totalorder %s94, %s95
      %p109 = scmp.eq.s32.totalorder %s21, 1
      %p110 = por %p108, %p109
      %p112 = scmp.ne.s32.totalorder %s95, %s111
      %p113 = scmp.eq.s32.totalorder %s21, 0
      %p114 = por %p112, %p113
      %p115 = scmp.le.s32.totalorder 1, %s15
      %p116 = scmp.lt.s32.totalorder %s15, 3
      %p117 = pnand %p115, %p116
      %p118 = pneg %p117
      // Predicated region
      $region9: #{tpu_custom_call.1} parent=5 // pred_check
        _
      $region10: #{tpu_custom_call.1} parent=5 // pred_check_branch
        %120 = sbr.rel (%p117) target = $region12
      $region11: #{tpu_custom_call.1} parent=5 // pred_region
        %s121 = ssub.s32 %s15, 1
        // Predicated region
        $region13: #{tpu_custom_call.1} parent=11 // pred_check
          %p122 = pneg %p53
        $region14: #{tpu_custom_call.1} parent=11 // pred_check_branch
          %124 = sbr.rel (%p122) target = $region16
        $region15: #{tpu_custom_call.1} parent=11 // pred_region
          %s125 = smul.u32 32, %s25
          %s127 = ssub.s32 2048, 2048
          %128 = vsyncadd [#allocation3], %s127
          %s129 = smul.addr %s125, 64
          %s130 = scalar_lea.hbm %s0, %s129
          %s131 = sshll.u32 [#allocation2], 4
          %s132 = int_to_ptr.vmem [resolvable:$true] %s131
          %137 = dma.hbm_to_vmem [thread:$0]  %s130, 2048, %s132, [#allocation3], 64, 64, 4
        $region16: #{tpu_custom_call.1} parent=11 // pred_fallthru
          _
      $region12: #{tpu_custom_call.1} parent=5 // pred_fallthru
        _
      %p138 = scmp.lt.s32.totalorder %s15, 2
      // Predicated region
      $region17: #{tpu_custom_call.1} parent=5 // pred_check
        %p139 = pneg %p138
      $region18: #{tpu_custom_call.1} parent=5 // pred_check_branch
        %141 = sbr.rel (%p139) target = $region20
      $region19: #{tpu_custom_call.1} parent=5 // pred_region
        // Predicated region
        $region21: #{tpu_custom_call.1} parent=19 // pred_check
          %p142 = pneg %p73
        $region22: #{tpu_custom_call.1} parent=19 // pred_check_branch
          %144 = sbr.rel (%p142) target = $region24
        $region23: #{tpu_custom_call.1} parent=19 // pred_region
          %s145 = sand.u32 %s63, 1
          %s146 = scalar_lea.sflag [#allocation6], %s145
          %s147 = sand.u32 %s63, 1
          %s148 = smul.addr %s147, 64
          %s149 = scalar_lea.vmem [#allocation5], %s148
          %s151 = ssub.s32 1024, 1024
          %152 = vsyncadd %s146, %s151
          %s153 = smul.addr %s22, 16
          %s154 = smul.addr %s153, 64
          %s155 = scalar_lea.hbm %s1, %s154
          %s156 = sshll.u32 %s149, 4
          %s157 = int_to_ptr.vmem [resolvable:$true] %s156
          %162 = dma.hbm_to_vmem [thread:$0]  %s155, 1024, %s157, %s146, 64, 64, 4
        $region24: #{tpu_custom_call.1} parent=19 // pred_fallthru
          _
      $region20: #{tpu_custom_call.1} parent=5 // pred_fallthru
        _
      %p163 = scmp.le.s32.totalorder 1, %s15
      %p164 = scmp.lt.s32.totalorder %s15, 3
      %p165 = pnand %p163, %p164
      %p166 = pneg %p165
      // Predicated region
      $region25: #{tpu_custom_call.1} parent=5 // pred_check
        _
      $region26: #{tpu_custom_call.1} parent=5 // pred_check_branch
        %168 = sbr.rel (%p165) target = $region28
      $region27: #{tpu_custom_call.1} parent=5 // pred_region
        %s169 = ssub.s32 %s15, 1
        // Predicated region
        $region29: #{tpu_custom_call.1} parent=27 // pred_check
          %p170 = pneg %p53
        $region30: #{tpu_custom_call.1} parent=27 // pred_check_branch
          %172 = sbr.rel (%p170) target = $region32
        $region31: #{tpu_custom_call.1} parent=27 // pred_region
          %173 = dma.done [#allocation3], 2048
        $region32: #{tpu_custom_call.1} parent=27 // pred_fallthru
          _
        %s174 = sand.u32 %s66, 1
        %s175 = scalar_lea.sflag [#allocation6], %s174
        %s176 = sand.u32 %s66, 1
        %s177 = smul.addr %s176, 64
        %s178 = scalar_lea.vmem [#allocation5], %s177
        // Predicated region
        $region33: #{tpu_custom_call.1} parent=27 // pred_check
          %p179 = pneg %p79
        $region34: #{tpu_custom_call.1} parent=27 // pred_check_branch
          %181 = sbr.rel (%p179) target = $region36
        $region35: #{tpu_custom_call.1} parent=27 // pred_region
          %182 = dma.done %s175, 1024
        $region36: #{tpu_custom_call.1} parent=27 // pred_fallthru
          _
        %p183 = pneg %p53
        %p184 = pneg %p50
        %s185 = sand.u32 %s66, 1
        %s186 = scalar_lea.sflag [#allocation6], %s185
        %s187 = sand.u32 %s66, 1
        %s188 = smul.addr %s187, 64
        %s189 = scalar_lea.vmem [#allocation5], %s188
        %p190 = pneg %p79
        %p191 = pneg %p76
        %p192 = pneg %p107
        %p193 = pneg %p104
        %s194 = sand.u32 %s94, 1
        %s195 = scalar_lea.sflag [#allocation4], %s194
        %s196 = sand.u32 %s94, 1
        %s197 = smul.addr %s196, 128
        %s198 = scalar_lea.vmem [#allocation7], %s197
        %s199 = smul.u32 32, %s25
        %s200 = smul.u32 32, %s25
        %v202 = vld [vmem:[#allocation2] sm:$0xf]
        %v203 = vld [vmem:[#allocation2 + $0x4] sm:$0xf]
        %v204 = vld [vmem:[#allocation2 + $0x8] sm:$0xf]
        %v205 = vld [vmem:[#allocation2 + $0xc] sm:$0xf]
        %v206 = vld [vmem:[#allocation2 + $0x10] sm:$0xf]
        %v207 = vld [vmem:[#allocation2 + $0x14] sm:$0xf]
        %v208 = vld [vmem:[#allocation2 + $0x18] sm:$0xf]
        %v209 = vld [vmem:[#allocation2 + $0x1c] sm:$0xf]
        %v210 = vld [vmem:[#allocation2 + $0x20] sm:$0xf]
        %v211 = vld [vmem:[#allocation2 + $0x24] sm:$0xf]
        %v212 = vld [vmem:[#allocation2 + $0x28] sm:$0xf]
        %v213 = vld [vmem:[#allocation2 + $0x2c] sm:$0xf]
        %v214 = vld [vmem:[#allocation2 + $0x30] sm:$0xf]
        %v215 = vld [vmem:[#allocation2 + $0x34] sm:$0xf]
        %v216 = vld [vmem:[#allocation2 + $0x38] sm:$0xf]
        %v217 = vld [vmem:[#allocation2 + $0x3c] sm:$0xf]
        %v218 = vld [vmem:[#allocation2 + $0x40] sm:$0xf]
        %v219 = vld [vmem:[#allocation2 + $0x44] sm:$0xf]
        %v220 = vld [vmem:[#allocation2 + $0x48] sm:$0xf]
        %v221 = vld [vmem:[#allocation2 + $0x4c] sm:$0xf]
        %v222 = vld [vmem:[#allocation2 + $0x50] sm:$0xf]
        %v223 = vld [vmem:[#allocation2 + $0x54] sm:$0xf]
        %v224 = vld [vmem:[#allocation2 + $0x58] sm:$0xf]
        %v225 = vld [vmem:[#allocation2 + $0x5c] sm:$0xf]
        %v226 = vld [vmem:[#allocation2 + $0x60] sm:$0xf]
        %v227 = vld [vmem:[#allocation2 + $0x64] sm:$0xf]
        %v228 = vld [vmem:[#allocation2 + $0x68] sm:$0xf]
        %v229 = vld [vmem:[#allocation2 + $0x6c] sm:$0xf]
        %v230 = vld [vmem:[#allocation2 + $0x70] sm:$0xf]
        %v231 = vld [vmem:[#allocation2 + $0x74] sm:$0xf]
        %v232 = vld [vmem:[#allocation2 + $0x78] sm:$0xf]
        %v233 = vld [vmem:[#allocation2 + $0x7c] sm:$0xf]
        %v234 = vld [vmem:[%s178] sm:$0xf]
        %v235 = vld [vmem:[%s178 + $0x4] sm:$0xf]
        %v236 = vld [vmem:[%s178 + $0x8] sm:$0xf]
        %v237 = vld [vmem:[%s178 + $0xc] sm:$0xf]
        %v238 = vld [vmem:[%s178 + $0x10] sm:$0xf]
        %v239 = vld [vmem:[%s178 + $0x14] sm:$0xf]
        %v240 = vld [vmem:[%s178 + $0x18] sm:$0xf]
        %v241 = vld [vmem:[%s178 + $0x1c] sm:$0xf]
        %v242 = vld [vmem:[%s178 + $0x20] sm:$0xf]
        %v243 = vld [vmem:[%s178 + $0x24] sm:$0xf]
        %v244 = vld [vmem:[%s178 + $0x28] sm:$0xf]
        %v245 = vld [vmem:[%s178 + $0x2c] sm:$0xf]
        %v246 = vld [vmem:[%s178 + $0x30] sm:$0xf]
        %v247 = vld [vmem:[%s178 + $0x34] sm:$0xf]
        %v248 = vld [vmem:[%s178 + $0x38] sm:$0xf]
        %v249 = vld [vmem:[%s178 + $0x3c] sm:$0xf]
        %v282 = vunpack.c.l.b16 %v202
        %v283 = vunpack.c.l.b16 %v203
        %v284 = vunpack.c.l.b16 %v204
        %v285 = vunpack.c.l.b16 %v205
        %v286 = vunpack.c.l.b16 %v206
        %v287 = vunpack.c.l.b16 %v207
        %v288 = vunpack.c.l.b16 %v208
        %v289 = vunpack.c.l.b16 %v209
        %v290 = vunpack.c.l.b16 %v210
        %v291 = vunpack.c.l.b16 %v211
        %v292 = vunpack.c.l.b16 %v212
        %v293 = vunpack.c.l.b16 %v213
        %v294 = vunpack.c.l.b16 %v214
        %v295 = vunpack.c.l.b16 %v215
        %v296 = vunpack.c.l.b16 %v216
        %v297 = vunpack.c.l.b16 %v217
        %v298 = vunpack.c.l.b16 %v218
        %v299 = vunpack.c.l.b16 %v219
        %v300 = vunpack.c.l.b16 %v220
        %v301 = vunpack.c.l.b16 %v221
        %v302 = vunpack.c.l.b16 %v222
        %v303 = vunpack.c.l.b16 %v223
        %v304 = vunpack.c.l.b16 %v224
        %v305 = vunpack.c.l.b16 %v225
        %v306 = vunpack.c.l.b16 %v226
        %v307 = vunpack.c.l.b16 %v227
        %v308 = vunpack.c.l.b16 %v228
        %v309 = vunpack.c.l.b16 %v229
        %v310 = vunpack.c.l.b16 %v230
        %v311 = vunpack.c.l.b16 %v231
        %v312 = vunpack.c.l.b16 %v232
        %v313 = vunpack.c.l.b16 %v233
        %v314 = vpack.c.b16 %v283, %v282
        %v315 = vpack.c.b16 %v285, %v284
        %v316 = vpack.c.b16 %v287, %v286
        %v317 = vpack.c.b16 %v289, %v288
        %v318 = vpack.c.b16 %v291, %v290
        %v319 = vpack.c.b16 %v293, %v292
        %v320 = vpack.c.b16 %v295, %v294
        %v321 = vpack.c.b16 %v297, %v296
        %v322 = vpack.c.b16 %v299, %v298
        %v323 = vpack.c.b16 %v301, %v300
        %v324 = vpack.c.b16 %v303, %v302
        %v325 = vpack.c.b16 %v305, %v304
        %v326 = vpack.c.b16 %v307, %v306
        %v327 = vpack.c.b16 %v309, %v308
        %v328 = vpack.c.b16 %v311, %v310
        %v329 = vpack.c.b16 %v313, %v312
        %v362 = vunpack.c.l.b16 %v234
        %v363 = vunpack.c.l.b16 %v235
        %v364 = vunpack.c.l.b16 %v236
        %v365 = vunpack.c.l.b16 %v237
        %v366 = vunpack.c.l.b16 %v238
        %v367 = vunpack.c.l.b16 %v239
        %v368 = vunpack.c.l.b16 %v240
        %v369 = vunpack.c.l.b16 %v241
        %v370 = vunpack.c.l.b16 %v242
        %v371 = vunpack.c.l.b16 %v243
        %v372 = vunpack.c.l.b16 %v244
        %v373 = vunpack.c.l.b16 %v245
        %v374 = vunpack.c.l.b16 %v246
        %v375 = vunpack.c.l.b16 %v247
        %v376 = vunpack.c.l.b16 %v248
        %v377 = vunpack.c.l.b16 %v249
        %v378 = vpack.c.b16 %v363, %v362
        %v379 = vpack.c.b16 %v365, %v364
        %v380 = vpack.c.b16 %v367, %v366
        %v381 = vpack.c.b16 %v369, %v368
        %v382 = vpack.c.b16 %v371, %v370
        %v383 = vpack.c.b16 %v373, %v372
        %v384 = vpack.c.b16 %v375, %v374
        %v385 = vpack.c.b16 %v377, %v376
        %394 = vmatprep.subr.bf16.mxu0 0
        %395 = vmatpush1.bf16.msra.mxu0 %v385
        %396 = vmatprep.subr.bf16.mxu0 0
        %397 = vmatpush1.bf16.msra.mxu0 %v384
        %398 = vmatprep.subr.bf16.mxu0 0
        %399 = vmatpush1.bf16.msra.mxu0 %v383
        %400 = vmatprep.subr.bf16.mxu0 0
        %401 = vmatpush1.bf16.msra.mxu0 %v382
        %402 = vmatprep.subr.bf16.mxu0 0
        %403 = vmatpush1.bf16.msra.mxu0 %v381
        %404 = vmatprep.subr.bf16.mxu0 0
        %405 = vmatpush1.bf16.msra.mxu0 %v380
        %406 = vmatprep.subr.bf16.mxu0 0
        %407 = vmatpush1.bf16.msra.mxu0 %v379
        %408 = vmatprep.subr.bf16.mxu0 0
        %409 = vmatpush1.bf16.msra.mxu0 %v378
        %410 = vmatprep.subr.bf16.mxu0 0
        %411 = vmatpush2.bf16.msra.mxu0 0
        %412 = vmatprep.subr.bf16.mxu0 0
        %413 = vmatpush2.bf16.msra.mxu0 0
        %414 = vmatprep.subr.bf16.mxu0 0
        %415 = vmatpush2.bf16.msra.mxu0 0
        %416 = vmatprep.subr.bf16.mxu0 0
        %417 = vmatpush2.bf16.msra.mxu0 0
        %418 = vmatprep.subr.bf16.mxu0 0
        %419 = vmatpush2.bf16.msra.mxu0 0
        %420 = vmatprep.subr.bf16.mxu0 0
        %421 = vmatpush2.bf16.msra.mxu0 0
        %422 = vmatprep.subr.bf16.mxu0 0
        %423 = vmatpush2.bf16.msra.mxu0 0
        %424 = vmatprep.subr.bf16.mxu0 0
        %425 = vmatpush2.bf16.msra.mxu0 0
        %426 = vmatprep.mubr.bf16.mxu0 0
        %427 = vmatmul.mubr.bf16.gmra.mxu0 %v314
        %v428 = vpop.f32.mrf.mxu0
        %v429 = vadd.f32 0.0, %v428
        %v430 = vpop.f32.mrf.mxu0
        %v431 = vpop.f32.mrf.mxu0
        %v432 = vadd.f32 0.0, %v431
        %v433 = vpop.f32.mrf.mxu0
        %434 = vmatprep.mubr.bf16.mxu0 0
        %435 = vmatmul.mubr.bf16.gmra.mxu0 %v315
        %v436 = vpop.f32.mrf.mxu0
        %v437 = vadd.f32 0.0, %v436
        %v438 = vpop.f32.mrf.mxu0
        %v439 = vpop.f32.mrf.mxu0
        %v440 = vadd.f32 0.0, %v439
        %v441 = vpop.f32.mrf.mxu0
        %442 = vmatprep.mubr.bf16.mxu0 0
        %443 = vmatmul.mubr.bf16.gmra.mxu0 %v316
        %v444 = vpop.f32.mrf.mxu0
        %v445 = vadd.f32 0.0, %v444
        %v446 = vpop.f32.mrf.mxu0
        %v447 = vpop.f32.mrf.mxu0
        %v448 = vadd.f32 0.0, %v447
        %v449 = vpop.f32.mrf.mxu0
        %450 = vmatprep.mubr.bf16.mxu0 0
        %451 = vmatmul.mubr.bf16.gmra.mxu0 %v317
        %v452 = vpop.f32.mrf.mxu0
        %v453 = vadd.f32 0.0, %v452
        %v454 = vpop.f32.mrf.mxu0
        %v455 = vpop.f32.mrf.mxu0
        %v456 = vadd.f32 0.0, %v455
        %v457 = vpop.f32.mrf.mxu0
        %458 = vmatprep.mubr.bf16.mxu0 0
        %459 = vmatmul.mubr.bf16.gmra.mxu0 %v318
        %v460 = vpop.f32.mrf.mxu0
        %v461 = vadd.f32 0.0, %v460
        %v462 = vpop.f32.mrf.mxu0
        %v463 = vpop.f32.mrf.mxu0
        %v464 = vadd.f32 0.0, %v463
        %v465 = vpop.f32.mrf.mxu0
        %466 = vmatprep.mubr.bf16.mxu0 0
        %467 = vmatmul.mubr.bf16.gmra.mxu0 %v319
        %v468 = vpop.f32.mrf.mxu0
        %v469 = vadd.f32 0.0, %v468
        %v470 = vpop.f32.mrf.mxu0
        %v471 = vpop.f32.mrf.mxu0
        %v472 = vadd.f32 0.0, %v471
        %v473 = vpop.f32.mrf.mxu0
        %474 = vmatprep.mubr.bf16.mxu0 0
        %475 = vmatmul.mubr.bf16.gmra.mxu0 %v320
        %v476 = vpop.f32.mrf.mxu0
        %v477 = vadd.f32 0.0, %v476
        %v478 = vpop.f32.mrf.mxu0
        %v479 = vpop.f32.mrf.mxu0
        %v480 = vadd.f32 0.0, %v479
        %v481 = vpop.f32.mrf.mxu0
        %482 = vmatprep.mubr.bf16.mxu0 0
        %483 = vmatmul.mubr.bf16.gmra.mxu0 %v321
        %v484 = vpop.f32.mrf.mxu0
        %v485 = vadd.f32 0.0, %v484
        %v486 = vpop.f32.mrf.mxu0
        %v487 = vpop.f32.mrf.mxu0
        %v488 = vadd.f32 0.0, %v487
        %v489 = vpop.f32.mrf.mxu0
        %490 = vmatprep.mubr.bf16.mxu0 0
        %491 = vmatmul.mubr.bf16.gmra.mxu0 %v322
        %v492 = vpop.f32.mrf.mxu0
        %v493 = vadd.f32 0.0, %v492
        %v494 = vpop.f32.mrf.mxu0
        %v495 = vpop.f32.mrf.mxu0
        %v496 = vadd.f32 0.0, %v495
        %v497 = vpop.f32.mrf.mxu0
        %498 = vmatprep.mubr.bf16.mxu0 0
        %499 = vmatmul.mubr.bf16.gmra.mxu0 %v323
        %v500 = vpop.f32.mrf.mxu0
        %v501 = vadd.f32 0.0, %v500
        %v502 = vpop.f32.mrf.mxu0
        %v503 = vpop.f32.mrf.mxu0
        %v504 = vadd.f32 0.0, %v503
        %v505 = vpop.f32.mrf.mxu0
        %506 = vmatprep.mubr.bf16.mxu0 0
        %507 = vmatmul.mubr.bf16.gmra.mxu0 %v324
        %v508 = vpop.f32.mrf.mxu0
        %v509 = vadd.f32 0.0, %v508
        %v510 = vpop.f32.mrf.mxu0
        %v511 = vpop.f32.mrf.mxu0
        %v512 = vadd.f32 0.0, %v511
        %v513 = vpop.f32.mrf.mxu0
        %514 = vmatprep.mubr.bf16.mxu0 0
        %515 = vmatmul.mubr.bf16.gmra.mxu0 %v325
        %v516 = vpop.f32.mrf.mxu0
        %v517 = vadd.f32 0.0, %v516
        %v518 = vpop.f32.mrf.mxu0
        %v519 = vpop.f32.mrf.mxu0
        %v520 = vadd.f32 0.0, %v519
        %v521 = vpop.f32.mrf.mxu0
        %522 = vmatprep.mubr.bf16.mxu0 0
        %523 = vmatmul.mubr.bf16.gmra.mxu0 %v326
        %v524 = vpop.f32.mrf.mxu0
        %v525 = vadd.f32 0.0, %v524
        %v526 = vpop.f32.mrf.mxu0
        %v527 = vpop.f32.mrf.mxu0
        %v528 = vadd.f32 0.0, %v527
        %v529 = vpop.f32.mrf.mxu0
        %530 = vmatprep.mubr.bf16.mxu0 0
        %531 = vmatmul.mubr.bf16.gmra.mxu0 %v327
        %v532 = vpop.f32.mrf.mxu0
        %v533 = vadd.f32 0.0, %v532
        %v534 = vpop.f32.mrf.mxu0
        %v535 = vpop.f32.mrf.mxu0
        %v536 = vadd.f32 0.0, %v535
        %v537 = vpop.f32.mrf.mxu0
        %538 = vmatprep.mubr.bf16.mxu0 0
        %539 = vmatmul.mubr.bf16.gmra.mxu0 %v328
        %v540 = vpop.f32.mrf.mxu0
        %v541 = vadd.f32 0.0, %v540
        %v542 = vpop.f32.mrf.mxu0
        %v543 = vpop.f32.mrf.mxu0
        %v544 = vadd.f32 0.0, %v543
        %v545 = vpop.f32.mrf.mxu0
        %546 = vmatprep.mubr.bf16.mxu0 0
        %547 = vmatmul.mubr.bf16.gmra.mxu0 %v329
        %v548 = vpop.f32.mrf.mxu0
        %v549 = vadd.f32 0.0, %v548
        %v550 = vpop.f32.mrf.mxu0
        %v551 = vpop.f32.mrf.mxu0
        %v552 = vadd.f32 0.0, %v551
        %v553 = vpop.f32.mrf.mxu0
        %554 = vdwg.mxu0
        %v555 = vpack.c.bf16 %v432, %v429
        %v556 = vpack.c.bf16 %v440, %v437
        %v557 = vpack.c.bf16 %v448, %v445
        %v558 = vpack.c.bf16 %v456, %v453
        %v559 = vpack.c.bf16 %v464, %v461
        %v560 = vpack.c.bf16 %v472, %v469
        %v561 = vpack.c.bf16 %v480, %v477
        %v562 = vpack.c.bf16 %v488, %v485
        %v563 = vpack.c.bf16 %v496, %v493
        %v564 = vpack.c.bf16 %v504, %v501
        %v565 = vpack.c.bf16 %v512, %v509
        %v566 = vpack.c.bf16 %v520, %v517
        %v567 = vpack.c.bf16 %v528, %v525
        %v568 = vpack.c.bf16 %v536, %v533
        %v569 = vpack.c.bf16 %v544, %v541
        %v570 = vpack.c.bf16 %v552, %v549
        %v587 = vunpack.c.l.b16 %v555
        %v588 = vunpack.c.h.b16 %v555
        %v589 = vunpack.c.l.b16 %v556
        %v590 = vunpack.c.h.b16 %v556
        %v591 = vunpack.c.l.b16 %v557
        %v592 = vunpack.c.h.b16 %v557
        %v593 = vunpack.c.l.b16 %v558
        %v594 = vunpack.c.h.b16 %v558
        %v595 = vunpack.c.l.b16 %v559
        %v596 = vunpack.c.h.b16 %v559
        %v597 = vunpack.c.l.b16 %v560
        %v598 = vunpack.c.h.b16 %v560
        %v599 = vunpack.c.l.b16 %v561
        %v600 = vunpack.c.h.b16 %v561
        %v601 = vunpack.c.l.b16 %v562
        %v602 = vunpack.c.h.b16 %v562
        %v603 = vunpack.c.l.b16 %v563
        %v604 = vunpack.c.h.b16 %v563
        %v605 = vunpack.c.l.b16 %v564
        %v606 = vunpack.c.h.b16 %v564
        %v607 = vunpack.c.l.b16 %v565
        %v608 = vunpack.c.h.b16 %v565
        %v609 = vunpack.c.l.b16 %v566
        %v610 = vunpack.c.h.b16 %v566
        %v611 = vunpack.c.l.b16 %v567
        %v612 = vunpack.c.h.b16 %v567
        %v613 = vunpack.c.l.b16 %v568
        %v614 = vunpack.c.h.b16 %v568
        %v615 = vunpack.c.l.b16 %v569
        %v616 = vunpack.c.h.b16 %v569
        %v617 = vunpack.c.l.b16 %v570
        %v618 = vunpack.c.h.b16 %v570
        %v619 = vpack.c.b16 %v587, %v587
        %v620 = vpack.c.b16 %v588, %v588
        %v621 = vpack.c.b16 %v589, %v589
        %v622 = vpack.c.b16 %v590, %v590
        %v623 = vpack.c.b16 %v591, %v591
        %v624 = vpack.c.b16 %v592, %v592
        %v625 = vpack.c.b16 %v593, %v593
        %v626 = vpack.c.b16 %v594, %v594
        %v627 = vpack.c.b16 %v595, %v595
        %v628 = vpack.c.b16 %v596, %v596
        %v629 = vpack.c.b16 %v597, %v597
        %v630 = vpack.c.b16 %v598, %v598
        %v631 = vpack.c.b16 %v599, %v599
        %v632 = vpack.c.b16 %v600, %v600
        %v633 = vpack.c.b16 %v601, %v601
        %v634 = vpack.c.b16 %v602, %v602
        %v635 = vpack.c.b16 %v603, %v603
        %v636 = vpack.c.b16 %v604, %v604
        %v637 = vpack.c.b16 %v605, %v605
        %v638 = vpack.c.b16 %v606, %v606
        %v639 = vpack.c.b16 %v607, %v607
        %v640 = vpack.c.b16 %v608, %v608
        %v641 = vpack.c.b16 %v609, %v609
        %v642 = vpack.c.b16 %v610, %v610
        %v643 = vpack.c.b16 %v611, %v611
        %v644 = vpack.c.b16 %v612, %v612
        %v645 = vpack.c.b16 %v613, %v613
        %v646 = vpack.c.b16 %v614, %v614
        %v647 = vpack.c.b16 %v615, %v615
        %v648 = vpack.c.b16 %v616, %v616
        %v649 = vpack.c.b16 %v617, %v617
        %v650 = vpack.c.b16 %v618, %v618
        %683 = vst [vmem:[%s198] sm:$0xf] %v619
        %684 = vst [vmem:[%s198 + $0x4] sm:$0xf] %v620
        %685 = vst [vmem:[%s198 + $0x8] sm:$0xf] %v621
        %686 = vst [vmem:[%s198 + $0xc] sm:$0xf] %v622
        %687 = vst [vmem:[%s198 + $0x10] sm:$0xf] %v623
        %688 = vst [vmem:[%s198 + $0x14] sm:$0xf] %v624
        %689 = vst [vmem:[%s198 + $0x18] sm:$0xf] %v625
        %690 = vst [vmem:[%s198 + $0x1c] sm:$0xf] %v626
        %691 = vst [vmem:[%s198 + $0x20] sm:$0xf] %v627
        %692 = vst [vmem:[%s198 + $0x24] sm:$0xf] %v628
        %693 = vst [vmem:[%s198 + $0x28] sm:$0xf] %v629
        %694 = vst [vmem:[%s198 + $0x2c] sm:$0xf] %v630
        %695 = vst [vmem:[%s198 + $0x30] sm:$0xf] %v631
        %696 = vst [vmem:[%s198 + $0x34] sm:$0xf] %v632
        %697 = vst [vmem:[%s198 + $0x38] sm:$0xf] %v633
        %698 = vst [vmem:[%s198 + $0x3c] sm:$0xf] %v634
        %699 = vst [vmem:[%s198 + $0x40] sm:$0xf] %v635
        %700 = vst [vmem:[%s198 + $0x44] sm:$0xf] %v636
        %701 = vst [vmem:[%s198 + $0x48] sm:$0xf] %v637
        %702 = vst [vmem:[%s198 + $0x4c] sm:$0xf] %v638
        %703 = vst [vmem:[%s198 + $0x50] sm:$0xf] %v639
        %704 = vst [vmem:[%s198 + $0x54] sm:$0xf] %v640
        %705 = vst [vmem:[%s198 + $0x58] sm:$0xf] %v641
        %706 = vst [vmem:[%s198 + $0x5c] sm:$0xf] %v642
        %707 = vst [vmem:[%s198 + $0x60] sm:$0xf] %v643
        %708 = vst [vmem:[%s198 + $0x64] sm:$0xf] %v644
        %709 = vst [vmem:[%s198 + $0x68] sm:$0xf] %v645
        %710 = vst [vmem:[%s198 + $0x6c] sm:$0xf] %v646
        %711 = vst [vmem:[%s198 + $0x70] sm:$0xf] %v647
        %712 = vst [vmem:[%s198 + $0x74] sm:$0xf] %v648
        %713 = vst [vmem:[%s198 + $0x78] sm:$0xf] %v649
        %714 = vst [vmem:[%s198 + $0x7c] sm:$0xf] %v650
        %s715 = sand.u32 %s94, 1
        %s716 = scalar_lea.sflag [#allocation4], %s715
        %s717 = sand.u32 %s94, 1
        %s718 = smul.addr %s717, 128
        %s719 = scalar_lea.vmem [#allocation7], %s718
        // Predicated region
        $region37: #{tpu_custom_call.1} parent=27 // pred_check
          %p720 = pneg %p104
        $region38: #{tpu_custom_call.1} parent=27 // pred_check_branch
          %722 = sbr.rel (%p720) target = $region40
        $region39: #{tpu_custom_call.1} parent=27 // pred_region
          %s723 = smul.u32 32, %s25
          %s725 = ssub.s32 2048, 2048
          %726 = vsyncadd %s716, %s725
          %s727 = smul.addr %s24, 32
          %s728 = sadd.s32 %s723, %s727
          %s729 = smul.addr %s728, 64
          %s730 = scalar_lea.hbm %s2, %s729
          %s731 = sshll.u32 %s719, 4
          %s732 = int_to_ptr.vmem [resolvable:$true] %s731
          %737 = dma.vmem_to_hbm [thread:$0]  %s732, 2048, %s730, %s716, 64, 64, 4
        $region40: #{tpu_custom_call.1} parent=27 // pred_fallthru
          _
      $region28: #{tpu_custom_call.1} parent=5 // pred_fallthru
        _
      %p738 = scmp.le.s32.totalorder 2, %s15
      // Predicated region
      $region41: #{tpu_custom_call.1} parent=5 // pred_check
        %p739 = pneg %p738
      $region42: #{tpu_custom_call.1} parent=5 // pred_check_branch
        %741 = sbr.rel (%p739) target = $region44
      $region43: #{tpu_custom_call.1} parent=5 // pred_region
        %s742 = ssub.s32 %s15, 2
        // Predicated region
        $region45: #{tpu_custom_call.1} parent=43 // pred_check
          %p743 = pneg %p110
        $region46: #{tpu_custom_call.1} parent=43 // pred_check_branch
          %745 = sbr.rel (%p743) target = $region48
        $region47: #{tpu_custom_call.1} parent=43 // pred_region
          %s746 = sand.u32 %s95, 1
          %s747 = scalar_lea.sflag [#allocation4], %s746
          %s748 = sand.u32 %s95, 1
          %s749 = smul.addr %s748, 128
          %s750 = scalar_lea.vmem [#allocation7], %s749
          %751 = dma.done %s747, 2048
        $region48: #{tpu_custom_call.1} parent=43 // pred_fallthru
          _
      $region44: #{tpu_custom_call.1} parent=5 // pred_fallthru
        _
    $region6: #{tpu_custom_call.1} parent=1 // loop_footer
      %s19 = sadd.s32 1, %s15
    $region7: #{tpu_custom_call.1} parent=1 // loop_footer_branch
      %14 = sbr.rel target = $region3
    $region8: #{tpu_custom_call.1} parent=1 // loop_exit
      _
    %752 = vsyncpa [#allocation3], 1
    %s753 = scalar_lea.sflag [#allocation3], 1
    %754 = vsyncpa %s753, 1
    %755 = vsyncpa [#allocation6], 1
    %s756 = scalar_lea.sflag [#allocation6], 1
    %757 = vsyncpa %s756, 1
    %758 = vsyncpa [#allocation4], 1
    %s759 = scalar_lea.sflag [#allocation4], 1
    %760 = vsyncpa %s759, 1

</llo_original>
